<compile_context>
chip_gen: v7x
topology: tpu7x:2x2x1
jax: 0.10.0
libtpu: 0.0.40
codegen_flags: <defaults>
</compile_context>

<pallas_src>
import functools
import math

import jax
import jax.numpy as jnp
from jax import lax
from jax.experimental import pallas as pl
from jax.experimental.pallas import tpu as pltpu

_LANE = 128
_MAX_TILE_B = 1024       # caps (TILE_B, 1) scratch lane-padding waste


def _cdiv(a: int, b: int) -> int:
    return -(-a // b)


def _sublane(itemsize: int) -> int:
    # Native sublane packing: 8 for 4-byte, 16 for 2-byte, 32 for 1-byte dtypes.
    return 8 * max(1, 4 // itemsize)


def _choose_tiles(b: int, n: int, itemsize: int, sub: int, block_bytes: int):
    """Pick (TILE_B, TILE_N) targeting ~block_bytes per input block.

    TILE_N is a multiple of 128 or exactly n; TILE_B is a multiple of the
    dtype's sublane packing or exactly b (Pallas (8,128) block rule).
    """
    tb = b if b <= sub else sub
    row_bytes = _LANE * itemsize
    max_lane_blocks = max(1, block_bytes // max(1, tb * row_bytes))
    n_lane_blocks = _cdiv(n, _LANE)
    if n_lane_blocks <= max_lane_blocks:
        # Whole sample width fits in one block: use the exact (possibly ragged)
        # width -> single N-tile, no in-kernel masking needed.
        tn = n
        if b > sub:
            # Grow the batch tile to fill the byte budget (keeps DMAs large and
            # coalesces output stores for the large-B / small-N regime).
            fit = block_bytes // max(1, n * itemsize)
            tb = max(sub, (fit // sub) * sub)
            tb = min(tb, (b // sub) * sub, _MAX_TILE_B)
    else:
        tn = max_lane_blocks * _LANE
    return tb, tn


def _ruzicka_kernel(o_ref, t_ref, r_ref, mn_acc, mx_acc, *,
                    shift: float, n_true: int, tile_n: int, mask_tail: bool):
    """One (TILE_B, TILE_N) slab per grid step; grid = (b_tiles, n_tiles)."""
    k = pl.program_id(1)

    @pl.when(k == 0)
    def _init():
        mn_acc[...] = jnp.zeros_like(mn_acc)
        mx_acc[...] = jnp.zeros_like(mx_acc)

    # Stream in native dtype, compute/accumulate in f32.
    o = o_ref[...].astype(jnp.float32)            # (TILE_B, TILE_N)
    t = t_ref[...].astype(jnp.float32)
    mn = jnp.minimum(o, t)
    mx = jnp.maximum(o, t)

    if mask_tail:
        # Ragged last N-tile: zero out-of-range columns so partial-block garbage
        # never reaches the sums (epsilon is added at finalize with the true
        # element count, so zeros are exact).  A few VPU ops per vreg -- far
        # below the HBM-bound budget.
        limit = n_true - k * tile_n
        col = lax.broadcasted_iota(jnp.int32, o.shape, 1)
        valid = col < limit
        mn = jnp.where(valid, mn, 0.0)
        mx = jnp.where(valid, mx, 0.0)

    # Per-sample partial sums.  The lane reduction's XLU cost is amortised over
    # TILE_N/128 vregs per 8-row group; the bulk of the work is VPU adds.
    mn_acc[...] += jnp.sum(mn, axis=1, keepdims=True)     # (TILE_B, 1)
    mx_acc[...] += jnp.sum(mx, axis=1, keepdims=True)

    @pl.when(k == pl.num_programs(1) - 1)
    def _finalize():
        mn_sum = mn_acc[...] + shift              # shift = N_true * epsilon
        mx_sum = mx_acc[...] + shift
        r_ref[...] = mn_sum / mx_sum              # coalesced per-sample ratios


def ruzicka_similarity(outputs: jax.Array, targets: jax.Array, *,
                       epsilon: float = 0.5,
                       block_bytes: int = 2 << 20) -> jax.Array:
    """Pallas implementation of RuzickaSimilarity (reduction='mean')."""
    assert outputs.shape == targets.shape
    b = outputs.shape[0]
    n = math.prod(outputs.shape[1:])

    # Free bitcast reshapes -- no HBM copies in the wrapper.
    o = outputs.reshape(b, n)
    t = targets.reshape(b, n)

    itemsize = o.dtype.itemsize
    sub = _sublane(itemsize)
    tb, tn = _choose_tiles(b, n, itemsize, sub, block_bytes)
    num_b = _cdiv(b, tb)
    num_n = _cdiv(n, tn)
    mask_tail = (num_n > 1) and (n % tn != 0)

    kernel = functools.partial(
        _ruzicka_kernel,
        shift=float(n) * float(epsilon),
        n_true=n, tile_n=tn, mask_tail=mask_tail)

    ratios = pl.pallas_call(
        kernel,
        out_shape=jax.ShapeDtypeStruct((b, 1), jnp.float32),
        grid_spec=pltpu.PrefetchScalarGridSpec(
            num_scalar_prefetch=0,
            grid=(num_b, num_n),
            in_specs=[
                pl.BlockSpec((tb, tn), lambda i, k: (i, k)),
                pl.BlockSpec((tb, tn), lambda i, k: (i, k)),
            ],
            out_specs=pl.BlockSpec((tb, 1), lambda i, k: (i, 0)),
            scratch_shapes=[
                pltpu.VMEM((tb, 1), jnp.float32),   # per-sample min partial sums
                pltpu.VMEM((tb, 1), jnp.float32),   # per-sample max partial sums
            ],
        ),
        compiler_params=pltpu.CompilerParams(
            dimension_semantics=("parallel", "arbitrary"),
        ),
    )(o, t)

    # Tiny epilogue: mean over batch + negative log (kept in JAX).
    r = jnp.mean(ratios)
    return -jnp.log(r)


def _reference(outputs, targets):
    # Pure-JAX reference mirroring the PyTorch loop.
    eps = 0.5
    o = outputs + eps
    t = targets + eps
    b = targets.shape[0]
    r = 0.0
    for i in range(b):
        r = r + jnp.minimum(o[i], t[i]).sum() / jnp.maximum(o[i], t[i]).sum()
    r = r / b
    return -jnp.log(r)


if __name__ == "__main__":
    key = jax.random.PRNGKey(0)

    def run_case(shape, block_bytes=2 << 20):
        k1, k2 = jax.random.split(key)
        outs = jax.random.uniform(k1, shape, dtype=jnp.float32)
        tgts = jax.random.uniform(k2, shape, dtype=jnp.float32)
        got = jax.block_until_ready(
            ruzicka_similarity(outs, tgts, block_bytes=block_bytes))
        ref = _reference(outs, tgts)
        assert jnp.allclose(got, ref, rtol=1e-5, atol=1e-5), (shape, got, ref)
        return got

    # Primary case: batch=2, channels=4, spatial=16x16 (N = 1024, single tile).
    run_case((2, 4, 16, 16))
    # Ragged batch (partial B block) + non-128-multiple sample width.
    run_case((10, 3, 7, 5))
    # Tiny block budget to exercise the tiled reduction + ragged-tail masking.
    run_case((3, 2, 25, 21), block_bytes=4 * 1024)

    print("KERNEL_OK")
</pallas_src>

<mosaic_0001>
module attributes {stable_mosaic.version = 11 : i64} {
  func.func @_ruzicka_kernel(%arg0: i32, %arg1: i32, %arg2: memref<2x1024xf32, #tpu.memory_space<vmem>>, %arg3: memref<2x1024xf32, #tpu.memory_space<vmem>>, %arg4: memref<2x1xf32, #tpu.memory_space<vmem>>, %arg5: memref<2x1xf32, #tpu.memory_space<vmem>>, %arg6: memref<2x1xf32, #tpu.memory_space<vmem>>) attributes {dimension_semantics = [#tpu.dimension_semantics<parallel>, #tpu.dimension_semantics<arbitrary>], iteration_bounds = array<i64: 1, 1>, scalar_prefetch = 0 : i64, scratch_operands = 2 : i64, tpu.core_type = #tpu.core_type<tc>, window_params = [{transform_indices = @transform_0, window_bounds = array<i64: 2, 1024>}, {transform_indices = @transform_1, window_bounds = array<i64: 2, 1024>}, {transform_indices = @transform_2, window_bounds = array<i64: 2, 1>}]} {
    %c0_i32 = arith.constant 0 : i32
    %0 = arith.cmpi eq, %arg1, %c0_i32 : i32
    %1 = arith.extui %0 : i1 to i32
    %c0_i32_0 = arith.constant 0 : i32
    %2 = arith.cmpi ne, %1, %c0_i32_0 : i32
    scf.if %2 {
      %cst_15 = arith.constant 0.000000e+00 : f32
      %20 = vector.broadcast %cst_15 : f32 to vector<2x1xf32>
      %c0_16 = arith.constant 0 : index
      %c0_17 = arith.constant 0 : index
      %21 = vector.load %arg5[%c0_16, %c0_17] : memref<2x1xf32, #tpu.memory_space<vmem>>, vector<2x1xf32>
      tpu.vector_store %arg5[%c0_16, %c0_17], %20 {strides = array<i32>} : memref<2x1xf32, #tpu.memory_space<vmem>>, vector<2x1xf32>,
      %cst_18 = arith.constant 0.000000e+00 : f32
      %22 = vector.broadcast %cst_18 : f32 to vector<2x1xf32>
      %c0_19 = arith.constant 0 : index
      %c0_20 = arith.constant 0 : index
      %23 = vector.load %arg6[%c0_19, %c0_20] : memref<2x1xf32, #tpu.memory_space<vmem>>, vector<2x1xf32>
      tpu.vector_store %arg6[%c0_19, %c0_20], %22 {strides = array<i32>} : memref<2x1xf32, #tpu.memory_space<vmem>>, vector<2x1xf32>,
    } else {
    }
    %c0 = arith.constant 0 : index
    %c0_1 = arith.constant 0 : index
    %3 = vector.load %arg2[%c0, %c0_1] : memref<2x1024xf32, #tpu.memory_space<vmem>>, vector<2x1024xf32>
    %c0_2 = arith.constant 0 : index
    %c0_3 = arith.constant 0 : index
    %4 = vector.load %arg3[%c0_2, %c0_3] : memref<2x1024xf32, #tpu.memory_space<vmem>>, vector<2x1024xf32>
    %5 = arith.minimumf %3, %4 : vector<2x1024xf32>
    %6 = arith.maximumf %3, %4 : vector<2x1024xf32>
    %c0_4 = arith.constant 0 : index
    %c0_5 = arith.constant 0 : index
    %7 = vector.load %arg5[%c0_4, %c0_5] : memref<2x1xf32, #tpu.memory_space<vmem>>, vector<2x1xf32>
    %cst = arith.constant dense<0.000000e+00> : vector<2xf32>
    %8 = vector.multi_reduction <add>, %5, %cst [1] : vector<2x1024xf32> to vector<2xf32>
    %9 = vector.shape_cast %8 : vector<2xf32> to vector<2x1xf32>
    %10 = arith.addf %7, %9 : vector<2x1xf32>
    %c0_6 = arith.constant 0 : index
    %c0_7 = arith.constant 0 : index
    %11 = vector.load %arg5[%c0_6, %c0_7] : memref<2x1xf32, #tpu.memory_space<vmem>>, vector<2x1xf32>
    tpu.vector_store %arg5[%c0_6, %c0_7], %10 {strides = array<i32>} : memref<2x1xf32, #tpu.memory_space<vmem>>, vector<2x1xf32>,
    %c0_8 = arith.constant 0 : index
    %c0_9 = arith.constant 0 : index
    %12 = vector.load %arg6[%c0_8, %c0_9] : memref<2x1xf32, #tpu.memory_space<vmem>>, vector<2x1xf32>
    %cst_10 = arith.constant dense<0.000000e+00> : vector<2xf32>
    %13 = vector.multi_reduction <add>, %6, %cst_10 [1] : vector<2x1024xf32> to vector<2xf32>
    %14 = vector.shape_cast %13 : vector<2xf32> to vector<2x1xf32>
    %15 = arith.addf %12, %14 : vector<2x1xf32>
    %c0_11 = arith.constant 0 : index
    %c0_12 = arith.constant 0 : index
    %16 = vector.load %arg6[%c0_11, %c0_12] : memref<2x1xf32, #tpu.memory_space<vmem>>, vector<2x1xf32>
    tpu.vector_store %arg6[%c0_11, %c0_12], %15 {strides = array<i32>} : memref<2x1xf32, #tpu.memory_space<vmem>>, vector<2x1xf32>,
    %c0_i32_13 = arith.constant 0 : i32
    %17 = arith.cmpi eq, %arg1, %c0_i32_13 : i32
    %18 = arith.extui %17 : i1 to i32
    %c0_i32_14 = arith.constant 0 : i32
    %19 = arith.cmpi ne, %18, %c0_i32_14 : i32
    scf.if %19 {
      %c0_15 = arith.constant 0 : index
      %c0_16 = arith.constant 0 : index
      %20 = vector.load %arg5[%c0_15, %c0_16] : memref<2x1xf32, #tpu.memory_space<vmem>>, vector<2x1xf32>
      %cst_17 = arith.constant 5.120000e+02 : f32
      %21 = vector.broadcast %cst_17 : f32 to vector<2x1xf32>
      %22 = arith.addf %20, %21 : vector<2x1xf32>
      %c0_18 = arith.constant 0 : index
      %c0_19 = arith.constant 0 : index
      %23 = vector.load %arg6[%c0_18, %c0_19] : memref<2x1xf32, #tpu.memory_space<vmem>>, vector<2x1xf32>
      %cst_20 = arith.constant 5.120000e+02 : f32
      %24 = vector.broadcast %cst_20 : f32 to vector<2x1xf32>
      %25 = arith.addf %23, %24 : vector<2x1xf32>
      %26 = arith.divf %22, %25 : vector<2x1xf32>
      %c0_21 = arith.constant 0 : index
      %c0_22 = arith.constant 0 : index
      %27 = vector.load %arg4[%c0_21, %c0_22] : memref<2x1xf32, #tpu.memory_space<vmem>>, vector<2x1xf32>
      tpu.vector_store %arg4[%c0_21, %c0_22], %26 {strides = array<i32>} : memref<2x1xf32, #tpu.memory_space<vmem>>, vector<2x1xf32>,
    } else {
    }
    return
  }
  func.func @transform_0(%arg0: i32, %arg1: i32) -> (i32, i32) {
    %c0_i32 = arith.constant 0 : i32
    return %arg0, %arg1 : i32, i32
  }
  func.func @transform_1(%arg0: i32, %arg1: i32) -> (i32, i32) {
    %c0_i32 = arith.constant 0 : i32
    return %arg0, %arg1 : i32, i32
  }
  func.func @transform_2(%arg0: i32, %arg1: i32) -> (i32, i32) {
    %c0_i32 = arith.constant 0 : i32
    %c0_i32_0 = arith.constant 0 : i32
    return %arg0, %c0_i32 : i32, i32
  }
}

</mosaic_0001>

<llo_original>
// kernel: tpu_custom_call.1
$region0: #{tpu_custom_call.1}
  #allocation0 [shape = 'u32[]', space=smem, size = 0x4, offset = 0x4, fixed_abs, tag = 'smem constant byte address 0x4 - core index']
  #allocation1 [shape = 'u32[144,128]{1,0:T(1,128)}', space=vmem, size = 0x12000, scoped, tag = 'internal scratch']
  #allocation2 [shape = 'f32[2,1]{1,0:T(2,128)}', space=vmem, size = 0x400, scoped, tag = 'scratch operand']
  #allocation3 [shape = 'f32[2,1]{1,0:T(2,128)}', space=vmem, size = 0x400, scoped, tag = 'scratch operand']
  %s0 = inlined_call_operand.hbm [shape: f32[2,1024], index: 0, kind: input, shape index: {}]
  %s1 = inlined_call_operand.hbm [shape: f32[2,1024], index: 1, kind: input, shape index: {}]
  %s2 = inlined_call_operand.vmem [shape: f32[2,1], index: 2, kind: output, shape index: {}]
  %s3 = sld [smem:[#allocation0]]
  $region34: #{tpu_custom_call.1} parent=0
    _
  %s5 = ssub.s32 1, %s3
  %s6 = scalar_select 0, %s5, %s3
  $region1: #{tpu_custom_call.1} parent=0
    #allocation4 [shape = 'u8[8192]{0}', space=vmem, size = 0x2000, scoped, tag = 'input window, operand 0, single buffered']
    #allocation5 [shape = 's32[1]{0}', space=sflag, size = 0x4, scoped, tag = 'scoped memory for tpu_custom_call.1']
    #allocation6 [shape = 'u8[8192]{0}', space=vmem, size = 0x2000, scoped, tag = 'input window, operand 1, single buffered']
    #allocation7 [shape = 's32[1]{0}', space=sflag, size = 0x4, scoped, tag = 'scoped memory for tpu_custom_call.1']
    %7 = vsyncpa [#allocation5], 0
    %8 = vsyncpa [#allocation7], 0
    // Predicated region
    $region2: #{tpu_custom_call.1} parent=1 // pred_check
      _
    $region3: #{tpu_custom_call.1} parent=1 // pred_check_branch
      %10 = sbr.rel (0) target = $region5
    $region4: #{tpu_custom_call.1} parent=1 // pred_region
      %s12 = ssub.s32 256, 256
      %13 = vsyncadd [#allocation5], %s12
      %s15 = sshll.u32 [#allocation4], 4
      %s16 = int_to_ptr.vmem [resolvable:$true] %s15
      %18 = dma.hbm_to_vmem [thread:$0]  %s0, 256, %s16, [#allocation5]
    $region5: #{tpu_custom_call.1} parent=1 // pred_fallthru
      _
    // Predicated region
    $region6: #{tpu_custom_call.1} parent=1 // pred_check
      _
    $region7: #{tpu_custom_call.1} parent=1 // pred_check_branch
      %20 = sbr.rel (0) target = $region9
    $region8: #{tpu_custom_call.1} parent=1 // pred_region
      %s22 = ssub.s32 256, 256
      %23 = vsyncadd [#allocation7], %s22
      %s25 = sshll.u32 [#allocation6], 4
      %s26 = int_to_ptr.vmem [resolvable:$true] %s25
      %28 = dma.hbm_to_vmem [thread:$0]  %s1, 256, %s26, [#allocation7]
    $region9: #{tpu_custom_call.1} parent=1 // pred_fallthru
      _
    // Predicated region
    $region10: #{tpu_custom_call.1} parent=1 // pred_check
      _
    $region11: #{tpu_custom_call.1} parent=1 // pred_check_branch
      %30 = sbr.rel (0) target = $region13
    $region12: #{tpu_custom_call.1} parent=1 // pred_region
      %31 = dma.done [#allocation5], 256
    $region13: #{tpu_custom_call.1} parent=1 // pred_fallthru
      _
    // Predicated region
    $region14: #{tpu_custom_call.1} parent=1 // pred_check
      _
    $region15: #{tpu_custom_call.1} parent=1 // pred_check_branch
      %33 = sbr.rel (0) target = $region17
    $region16: #{tpu_custom_call.1} parent=1 // pred_region
      %34 = dma.done [#allocation7], 256
    $region17: #{tpu_custom_call.1} parent=1 // pred_fallthru
      _
    %p35 = scmp.eq.s32.totalorder 0, 0
    // Predicated region
    $region18: #{tpu_custom_call.1} parent=1 // pred_check
      %p36 = pneg %p35
    $region19: #{tpu_custom_call.1} parent=1 // pred_check_branch
      %38 = sbr.rel (%p36) target = $region21
    $region20: #{tpu_custom_call.1} parent=1 // pred_region
      %vm39 = vcmask 1024
      %40 = vst.msk [vmem:[#allocation2] sm:$0x3] %vm39, 0.0
      %41 = vst.msk [vmem:[#allocation3] sm:$0x3] %vm39, 0.0
    $region21: #{tpu_custom_call.1} parent=1 // pred_fallthru
      _
    %v42 = vld [vmem:[#allocation4] sm:$0xff]
    %v43 = vld [vmem:[#allocation4 + $0x8] sm:$0xff]
    %v44 = vld [vmem:[#allocation6] sm:$0xff]
    %v45 = vld [vmem:[#allocation6 + $0x8] sm:$0xff]
    %v46 = vmin.f32 %v42, %v44
    %v47 = vmin.f32 %v43, %v45
    %v48 = vmax.f32 %v42, %v44
    %v49 = vmax.f32 %v43, %v45
    %v50 = vld [vmem:[#allocation2] sm:$0x3]
    %v53 = vcombine.high %v46, %v46
    %v55 = vunpack.c.l.s4 1983009808
    %v56 = vunpack.c.0.s8 %v55
    %v57 = vlaneseq
    %v58 = vshrl.u32 %v57, 7
    %v59 = vsub.s32 %v56, %v58
    %v60 = vrot.slane %v46, %v59
    %v62 = vunpack.c.l.s4 1983009808
    %v63 = vunpack.c.0.s8 %v62
    %v64 = vlaneseq
    %v65 = vshrl.u32 %v64, 7
    %v66 = vsub.s32 %v63, %v65
    %v67 = vrot.slane %v53, %v66
    %v68 = vcombine.high %v60, %v60
    %v69 = vcombine.high %v67, %v67
    %v70 = vcombine.high %v47, %v47
    %v72 = vunpack.c.l.s4 1983009808
    %v73 = vunpack.c.0.s8 %v72
    %v74 = vlaneseq
    %v75 = vshrl.u32 %v74, 7
    %v76 = vsub.s32 %v73, %v75
    %v77 = vrot.slane %v47, %v76
    %v79 = vunpack.c.l.s4 1983009808
    %v80 = vunpack.c.0.s8 %v79
    %v81 = vlaneseq
    %v82 = vshrl.u32 %v81, 7
    %v83 = vsub.s32 %v80, %v82
    %v84 = vrot.slane %v70, %v83
    %v85 = vcombine.high %v77, %v77
    %v86 = vcombine.high %v84, %v84
    %vm95 = vcmask 1041408
    %v96 = vsel %vm95, %v60, 0.0
    %v97 = vsel %vm95, %v68, 0.0
    %v98 = vadd.f32 %v96, %v97
    %v99 = vsel %vm95, %v67, 0.0
    %v100 = vadd.f32 %v98, %v99
    %v101 = vsel %vm95, %v69, 0.0
    %v102 = vadd.f32 %v100, %v101
    %v103 = vsel %vm95, %v77, 0.0
    %v104 = vadd.f32 %v102, %v103
    %v105 = vsel %vm95, %v85, 0.0
    %v106 = vadd.f32 %v104, %v105
    %v107 = vsel %vm95, %v84, 0.0
    %v108 = vadd.f32 %v106, %v107
    %v109 = vsel %vm95, %v86, 0.0
    %v110 = vadd.f32 %v108, %v109
    %111 = vadd.xlane.f32.xlu0 %v110
    %v112 = vpop.xlane.xlu0 %111
    %v113 = vadd.f32 %v50, %v112
    %vm114 = vcmask 1024
    %115 = vst.msk [vmem:[#allocation2] sm:$0x3] %vm114, %v113
    %v116 = vld [vmem:[#allocation3] sm:$0x3]
    %v119 = vcombine.high %v48, %v48
    %v121 = vunpack.c.l.s4 1983009808
    %v122 = vunpack.c.0.s8 %v121
    %v123 = vlaneseq
    %v124 = vshrl.u32 %v123, 7
    %v125 = vsub.s32 %v122, %v124
    %v126 = vrot.slane %v48, %v125
    %v128 = vunpack.c.l.s4 1983009808
    %v129 = vunpack.c.0.s8 %v128
    %v130 = vlaneseq
    %v131 = vshrl.u32 %v130, 7
    %v132 = vsub.s32 %v129, %v131
    %v133 = vrot.slane %v119, %v132
    %v134 = vcombine.high %v126, %v126
    %v135 = vcombine.high %v133, %v133
    %v136 = vcombine.high %v49, %v49
    %v138 = vunpack.c.l.s4 1983009808
    %v139 = vunpack.c.0.s8 %v138
    %v140 = vlaneseq
    %v141 = vshrl.u32 %v140, 7
    %v142 = vsub.s32 %v139, %v141
    %v143 = vrot.slane %v49, %v142
    %v145 = vunpack.c.l.s4 1983009808
    %v146 = vunpack.c.0.s8 %v145
    %v147 = vlaneseq
    %v148 = vshrl.u32 %v147, 7
    %v149 = vsub.s32 %v146, %v148
    %v150 = vrot.slane %v136, %v149
    %v151 = vcombine.high %v143, %v143
    %v152 = vcombine.high %v150, %v150
    %v161 = vsel %vm95, %v126, 0.0
    %v162 = vsel %vm95, %v134, 0.0
    %v163 = vadd.f32 %v161, %v162
    %v164 = vsel %vm95, %v133, 0.0
    %v165 = vadd.f32 %v163, %v164
    %v166 = vsel %vm95, %v135, 0.0
    %v167 = vadd.f32 %v165, %v166
    %v168 = vsel %vm95, %v143, 0.0
    %v169 = vadd.f32 %v167, %v168
    %v170 = vsel %vm95, %v151, 0.0
    %v171 = vadd.f32 %v169, %v170
    %v172 = vsel %vm95, %v150, 0.0
    %v173 = vadd.f32 %v171, %v172
    %v174 = vsel %vm95, %v152, 0.0
    %v175 = vadd.f32 %v173, %v174
    %176 = vadd.xlane.f32.xlu0 %v175
    %v177 = vpop.xlane.xlu0 %176
    %v178 = vadd.f32 %v116, %v177
    %179 = vst.msk [vmem:[#allocation3] sm:$0x3] %vm114, %v178
    // Predicated region
    $region22: #{tpu_custom_call.1} parent=1 // pred_check
      %p180 = pneg %p35
    $region23: #{tpu_custom_call.1} parent=1 // pred_check_branch
      %182 = sbr.rel (%p180) target = $region25
    $region24: #{tpu_custom_call.1} parent=1 // pred_region
      %v183 = vld [vmem:[#allocation2] sm:$0x3]
      %v184 = vadd.f32 %v183, 512.0
      %v185 = vld [vmem:[#allocation3] sm:$0x3]
      %v186 = vadd.f32 %v185, 512.0
      %v187 = vrcp.pop %v186
      %v188 = vmul.f32 %v184, %v187
      %189 = vst.msk [vmem:[%s2] sm:$0x3] %vm114, %v188
    $region25: #{tpu_custom_call.1} parent=1 // pred_fallthru
      _
    // Predicated region
    $region26: #{tpu_custom_call.1} parent=1 // pred_check
      _
    $region27: #{tpu_custom_call.1} parent=1 // pred_check_branch
      %191 = sbr.rel (0) target = $region29
    $region28: #{tpu_custom_call.1} parent=1 // pred_region
      _
    $region29: #{tpu_custom_call.1} parent=1 // pred_fallthru
      _
    // Predicated region
    $region30: #{tpu_custom_call.1} parent=1 // pred_check
      _
    $region31: #{tpu_custom_call.1} parent=1 // pred_check_branch
      %193 = sbr.rel (0) target = $region33
    $region32: #{tpu_custom_call.1} parent=1 // pred_region
      _
    $region33: #{tpu_custom_call.1} parent=1 // pred_fallthru
      _
    %194 = vsyncpa [#allocation5], 1
    %195 = vsyncpa [#allocation7], 1

</llo_original>
